<compile_context>
chip_gen: v6e
topology: v6e:2x2x1
jax: 0.10.0
libtpu: 0.0.40
codegen_flags: <defaults>
</compile_context>

<pallas_src>
import functools
import math

import jax
import jax.numpy as jnp
from jax import lax
from jax.experimental import pallas as pl
from jax.experimental.pallas import tpu as pltpu

_NEG_BIG = -1e30   # "-inf" stand-in that stays NaN-free through max/exp/log


def _sinkhorn_kernel(x_ref, y_ref, pi_ref,
                     nce_ref, u_ref, v_ref, err_ref,
                     *, eps, max_iter, thresh, n_true, m_true):
    f32 = jnp.float32
    x = x_ref[...].astype(f32)                       # (N_pad, D_pad)
    y = y_ref[...].astype(f32)                       # (M_pad, D_pad)
    n_pad = x.shape[0]
    m_pad = y.shape[0]

    inv_eps = f32(1.0 / eps)
    eps_f = f32(eps)
    thresh_f = f32(thresh)
    log_mu = f32(math.log(1.0 / n_true + 1e-8))      # log(mu + 1e-8), mu = 1/N
    log_nu = f32(math.log(1.0 / m_true + 1e-8))      # log(nu + 1e-8), nu = 1/M

    # ---- one-time cost matrix, pre-scaled by -1/eps (hoisted out of the loop)
    # ||x_i - y_j||^2 = ||x_i||^2 + ||y_j||^2 - 2 x_i.y_j   (MXU-friendly form)
    x2 = jnp.sum(x * x, axis=-1, keepdims=True)                        # (N_pad, 1)
    y2 = jnp.sum(y * y, axis=-1)[None, :]                              # (1, M_pad)
    xy = jnp.einsum("nd,md->nm", x, y, preferred_element_type=f32)     # (N_pad, M_pad)
    C = jnp.maximum(x2 + y2 - 2.0 * xy, 0.0)     # clamp tiny cancellation negatives
    nce = C * (-inv_eps)                         # nce = -C / eps

    # Mask padded rows/cols so they never contribute to any logsumexp.
    row_keep = None
    col_keep = None
    if n_pad > n_true:
        row_keep = lax.broadcasted_iota(jnp.int32, (n_pad, 1), 0) < n_true
        nce = jnp.where(row_keep, nce, f32(_NEG_BIG))
    if m_pad > m_true:
        col_keep = lax.broadcasted_iota(jnp.int32, (1, m_pad), 1) < m_true
        nce = jnp.where(col_keep, nce, f32(_NEG_BIG))

    nce_ref[...] = nce
    u_ref[...] = jnp.zeros_like(u_ref)               # duals carried as u/eps, v/eps
    v_ref[...] = jnp.zeros_like(v_ref)
    err_ref[...] = jnp.full_like(err_ref, f32(1e30))  # "not converged yet"

    def lse_rows(a):   # logsumexp over j -> (N_pad, 1)
        m = jnp.max(a, axis=-1, keepdims=True)
        return m + jnp.log(jnp.sum(jnp.exp(a - m), axis=-1, keepdims=True))

    def lse_cols(a):   # logsumexp over i -> (1, M_pad)
        m = jnp.max(a, axis=0, keepdims=True)
        return m + jnp.log(jnp.sum(jnp.exp(a - m), axis=0, keepdims=True))

    def body(_, carry):
        # Early exit: once err < thresh the whole dual update is branch-skipped
        # (matches PyTorch's break-after-the-converging-iteration semantics).
        @pl.when(err_ref[0, 0] >= thresh_f)
        def _():
            k = nce_ref[...]
            u_s = u_ref[...]
            v_s = v_ref[...]
            u_new = log_mu - lse_rows(k + u_s + v_s) + u_s       # == u_new / eps
            if row_keep is not None:
                u_new = jnp.where(row_keep, u_new, 0.0)
            v_new = log_nu - lse_cols(k + u_new + v_s) + v_s     # == v_new / eps
            if col_keep is not None:
                v_new = jnp.where(col_keep, v_new, 0.0)
            u_ref[...] = u_new
            v_ref[...] = v_new
            # err = sum_i |u_i - u_prev_i| in un-scaled units (hence * eps)
            err_ref[...] = eps_f * jnp.sum(jnp.abs(u_new - u_s),
                                           axis=0, keepdims=True)
        return carry

    lax.fori_loop(0, max_iter, body, 0)

    # pi = exp((-C + u + v) / eps); padded rows/cols give exp(-1e30) == 0 and
    # are sliced off in the wrapper.
    pi_ref[...] = jnp.exp(nce_ref[...] + u_ref[...] + v_ref[...]).astype(pi_ref.dtype)


def _round_up(x, m):
    return ((x + m - 1) // m) * m


def sinkhorn_distance(x, y, *, eps=0.1, max_iter=100, thresh=0.1):
    """Returns the transport plan pi (matches SinkhornDistance(eps, max_iter).forward)."""
    x = jnp.asarray(x, jnp.float32)
    y = jnp.asarray(y, jnp.float32)
    squeeze = x.ndim == 2
    if squeeze:                      # the PyTorch module also accepts unbatched input
        x, y = x[None], y[None]
    B, N, D = x.shape
    By, M, Dy = y.shape
    assert By == B and Dy == D, "x and y must share batch and feature dims"

    # Lane-dense padding: the (N_pad, M_pad) working set is (8, 128)-aligned so
    # every VPU/EUP op in the Sinkhorn loop runs at full lane occupancy and the
    # pi store is a full-width vst; D is padded to 128 for aligned MXU loads.
    n_pad = _round_up(N, 8)
    m_pad = _round_up(M, 128)
    d_pad = _round_up(D, 128)
    x_p = jnp.pad(x, ((0, 0), (0, n_pad - N), (0, d_pad - D)))
    y_p = jnp.pad(y, ((0, 0), (0, m_pad - M), (0, d_pad - D)))

    kernel = functools.partial(
        _sinkhorn_kernel, eps=float(eps), max_iter=int(max_iter),
        thresh=float(thresh), n_true=N, m_true=M)

    # Per-grid-step VMEM budget: double-buffered x/y/pi blocks + scratch + a few
    # live (N_pad, M_pad) temporaries. Raise the scoped limit only when the
    # smallest default (16 MiB, v5e) would not cover it; cap below v7x's 64 MiB.
    vmem_bytes = 4 * (2 * (n_pad * d_pad + m_pad * d_pad + n_pad * m_pad)
                      + n_pad * m_pad + n_pad + m_pad + 1
                      + 6 * n_pad * m_pad)
    params = dict(dimension_semantics=("parallel",))   # batches are independent
    if vmem_bytes > 16 * 1024 * 1024:
        params["vmem_limit_bytes"] = int(min(max(2 * vmem_bytes, 32 * 1024 * 1024),
                                             60 * 1024 * 1024))
    # TODO(synk): for very large per-batch N*M (working set beyond v7x's 64 MiB
    # VMEM), additionally tile N with an inner pltpu.emit_pipeline.

    pi_padded = pl.pallas_call(
        kernel,
        out_shape=jax.ShapeDtypeStruct((B, n_pad, m_pad), jnp.float32),
        grid_spec=pltpu.PrefetchScalarGridSpec(
            num_scalar_prefetch=0,
            grid=(B,),
            in_specs=[
                pl.BlockSpec((None, n_pad, d_pad), lambda b: (b, 0, 0)),
                pl.BlockSpec((None, m_pad, d_pad), lambda b: (b, 0, 0)),
            ],
            out_specs=pl.BlockSpec((None, n_pad, m_pad), lambda b: (b, 0, 0)),
            scratch_shapes=[
                pltpu.VMEM((n_pad, m_pad), jnp.float32),   # -C/eps (masked)
                pltpu.VMEM((n_pad, 1), jnp.float32),       # u / eps
                pltpu.VMEM((1, m_pad), jnp.float32),       # v / eps
                pltpu.VMEM((1, 1), jnp.float32),           # convergence error
            ],
        ),
        compiler_params=pltpu.CompilerParams(**params),
    )(x_p, y_p)

    pi = pi_padded[:, :N, :M]
    return pi[0] if squeeze else pi


if __name__ == "__main__":
    key = jax.random.PRNGKey(0)
    kx, ky = jax.random.split(key)
    B, N, M, D = 2, 8, 8, 32
    x = jax.random.normal(kx, (B, N, D), dtype=jnp.float32)
    y = jax.random.normal(ky, (B, M, D), dtype=jnp.float32)

    pi = sinkhorn_distance(x, y, eps=0.1, max_iter=100)
    jax.block_until_ready(pi)

    assert pi.shape == (B, N, M) and pi.dtype == jnp.float32
    assert bool(jnp.all(jnp.isfinite(pi)))
    # The last Sinkhorn half-step updates v, so the column marginals of pi equal
    # exp(log(1/M + 1e-8)) by construction — cheap end-to-end sanity check.
    col_sums = jnp.sum(pi, axis=1)
    assert bool(jnp.allclose(col_sums, 1.0 / M + 1e-8, rtol=5e-3, atol=1e-5))
    print("KERNEL_OK")
</pallas_src>

<mosaic_0001>
module attributes {stable_mosaic.version = 11 : i64} {
  func.func @_sinkhorn_kernel(%arg0: i32, %arg1: memref<1x8x128xf32, #tpu.memory_space<vmem>>, %arg2: memref<1x128x128xf32, #tpu.memory_space<vmem>>, %arg3: memref<1x8x128xf32, #tpu.memory_space<vmem>>, %arg4: memref<8x128xf32, #tpu.memory_space<vmem>>, %arg5: memref<8x1xf32, #tpu.memory_space<vmem>>, %arg6: memref<1x128xf32, #tpu.memory_space<vmem>>, %arg7: memref<1x1xf32, #tpu.memory_space<vmem>>) attributes {dimension_semantics = [#tpu.dimension_semantics<parallel>], iteration_bounds = array<i64: 2>, scalar_prefetch = 0 : i64, scratch_operands = 4 : i64, tpu.core_type = #tpu.core_type<tc>, window_params = [{transform_indices = @transform_0, window_bounds = array<i64: 1, 8, 128>}, {transform_indices = @transform_1, window_bounds = array<i64: 1, 128, 128>}, {transform_indices = @transform_2, window_bounds = array<i64: 1, 8, 128>}]} {
    %c0 = arith.constant 0 : index
    %c0_0 = arith.constant 0 : index
    %c0_1 = arith.constant 0 : index
    %0 = vector.load %arg1[%c0, %c0_0, %c0_1] : memref<1x8x128xf32, #tpu.memory_space<vmem>>, vector<1x8x128xf32>
    %1 = vector.shape_cast %0 : vector<1x8x128xf32> to vector<8x128xf32>
    %c0_2 = arith.constant 0 : index
    %c0_3 = arith.constant 0 : index
    %c0_4 = arith.constant 0 : index
    %2 = vector.load %arg2[%c0_2, %c0_3, %c0_4] : memref<1x128x128xf32, #tpu.memory_space<vmem>>, vector<1x128x128xf32>
    %3 = vector.shape_cast %2 : vector<1x128x128xf32> to vector<128x128xf32>
    %4 = arith.mulf %1, %1 : vector<8x128xf32>
    %cst = arith.constant dense<0.000000e+00> : vector<8xf32>
    %5 = vector.multi_reduction <add>, %4, %cst [1] : vector<8x128xf32> to vector<8xf32>
    %6 = vector.shape_cast %5 : vector<8xf32> to vector<8x1xf32>
    %7 = arith.mulf %3, %3 : vector<128x128xf32>
    %cst_5 = arith.constant dense<0.000000e+00> : vector<128xf32>
    %8 = vector.multi_reduction <add>, %7, %cst_5 [1] : vector<128x128xf32> to vector<128xf32>
    %9 = vector.shape_cast %8 : vector<128xf32> to vector<1x128xf32>
    "tpu.trace_start"() <{level = 10 : i32, message = "nd,md->nm"}> : () -> ()
    %cst_6 = arith.constant dense<0.000000e+00> : vector<8x128xf32>
    %10 = tpu.matmul %1, %3, %cst_6 {dimension_numbers = #tpu.dot_dimension_numbers<[1], [1], [0], [0], [0, 0, 1, 0], [], []>} : vector<8x128xf32>, vector<128x128xf32>, vector<8x128xf32> -> vector<8x128xf32>
    "tpu.trace_stop"() : () -> ()
    %11 = vector.broadcast %6 : vector<8x1xf32> to vector<8x128xf32>
    %12 = vector.broadcast %9 : vector<1x128xf32> to vector<8x128xf32>
    %13 = arith.addf %11, %12 : vector<8x128xf32>
    %cst_7 = arith.constant 2.000000e+00 : f32
    %14 = vector.broadcast %cst_7 : f32 to vector<8x128xf32>
    %15 = arith.mulf %14, %10 : vector<8x128xf32>
    %16 = arith.subf %13, %15 : vector<8x128xf32>
    %cst_8 = arith.constant 0.000000e+00 : f32
    %17 = vector.broadcast %cst_8 : f32 to vector<8x128xf32>
    %18 = arith.maximumf %16, %17 : vector<8x128xf32>
    %cst_9 = arith.constant 0.000000e+00 : f32
    %cst_10 = arith.constant 1.000000e+01 : f32
    %19 = arith.subf %cst_9, %cst_10 : f32
    %20 = vector.broadcast %19 : f32 to vector<8x128xf32>
    %21 = arith.mulf %18, %20 : vector<8x128xf32>
    %22 = tpu.iota {dimensions = array<i32: 1>} : vector<1x128xi32>
    %c8_i32 = arith.constant 8 : i32
    %23 = vector.broadcast %c8_i32 : i32 to vector<1x128xi32>
    %24 = arith.cmpi slt, %22, %23 : vector<1x128xi32>
    %cst_11 = arith.constant -1.000000e+30 : f32
    %25 = vector.shape_cast %24 : vector<1x128xi1> to vector<1x128xi1>
    %26 = vector.broadcast %25 : vector<1x128xi1> to vector<8x128xi1>
    %27 = vector.broadcast %cst_11 : f32 to vector<8x128xf32>
    %28 = arith.select %26, %21, %27 : vector<8x128xi1>, vector<8x128xf32>
    %c0_12 = arith.constant 0 : index
    %c0_13 = arith.constant 0 : index
    %29 = vector.load %arg4[%c0_12, %c0_13] : memref<8x128xf32, #tpu.memory_space<vmem>>, vector<8x128xf32>
    tpu.vector_store %arg4[%c0_12, %c0_13], %28 {strides = array<i32>} : memref<8x128xf32, #tpu.memory_space<vmem>>, vector<8x128xf32>,
    %cst_14 = arith.constant 0.000000e+00 : f32
    %30 = vector.broadcast %cst_14 : f32 to vector<8x1xf32>
    %c0_15 = arith.constant 0 : index
    %c0_16 = arith.constant 0 : index
    %31 = vector.load %arg5[%c0_15, %c0_16] : memref<8x1xf32, #tpu.memory_space<vmem>>, vector<8x1xf32>
    tpu.vector_store %arg5[%c0_15, %c0_16], %30 {strides = array<i32>} : memref<8x1xf32, #tpu.memory_space<vmem>>, vector<8x1xf32>,
    %cst_17 = arith.constant 0.000000e+00 : f32
    %32 = vector.broadcast %cst_17 : f32 to vector<1x128xf32>
    %c0_18 = arith.constant 0 : index
    %c0_19 = arith.constant 0 : index
    %33 = vector.load %arg6[%c0_18, %c0_19] : memref<1x128xf32, #tpu.memory_space<vmem>>, vector<1x128xf32>
    tpu.vector_store %arg6[%c0_18, %c0_19], %32 {strides = array<i32>} : memref<1x128xf32, #tpu.memory_space<vmem>>, vector<1x128xf32>,
    %cst_20 = arith.constant 1.000000e+30 : f32
    %34 = vector.broadcast %cst_20 : f32 to vector<1x1xf32>
    %c0_21 = arith.constant 0 : index
    %c0_22 = arith.constant 0 : index
    %35 = vector.load %arg7[%c0_21, %c0_22] : memref<1x1xf32, #tpu.memory_space<vmem>>, vector<1x1xf32>
    tpu.vector_store %arg7[%c0_21, %c0_22], %34 {strides = array<i32>} : memref<1x1xf32, #tpu.memory_space<vmem>>, vector<1x1xf32>,
    %cst_23 = arith.constant 1.000000e-01 : f32
    %cst_24 = arith.constant -2.07944155 : f32
    %cst_25 = arith.constant -2.07944155 : f32
    %cst_26 = arith.constant 1.000000e-01 : f32
    %c0_i32 = arith.constant 0 : i32
    %c100_i32 = arith.constant 100 : i32
    %36 = arith.addi %c0_i32, %c100_i32 : i32
    %c1_i32 = arith.constant 1 : i32
    scf.for %arg8 = %c0_i32 to %36 step %c1_i32  : i32 {
      %c0_36 = arith.constant 0 : index
      %c0_37 = arith.constant 0 : index
      %48 = vector.load %arg7[%c0_36, %c0_37] : memref<1x1xf32, #tpu.memory_space<vmem>>, vector<1x1xf32>
      %49 = vector.extract %48[0, 0] : f32 from vector<1x1xf32>
      %50 = arith.cmpf oge, %49, %cst_23 : f32
      %51 = arith.extui %50 : i1 to i32
      %c0_i32_38 = arith.constant 0 : i32
      %52 = arith.cmpi ne, %51, %c0_i32_38 : i32
      scf.if %52 {
        %c0_39 = arith.constant 0 : index
        %c0_40 = arith.constant 0 : index
        %53 = vector.load %arg4[%c0_39, %c0_40] : memref<8x128xf32, #tpu.memory_space<vmem>>, vector<8x128xf32>
        %c0_41 = arith.constant 0 : index
        %c0_42 = arith.constant 0 : index
        %54 = vector.load %arg5[%c0_41, %c0_42] : memref<8x1xf32, #tpu.memory_space<vmem>>, vector<8x1xf32>
        %c0_43 = arith.constant 0 : index
        %c0_44 = arith.constant 0 : index
        %55 = vector.load %arg6[%c0_43, %c0_44] : memref<1x128xf32, #tpu.memory_space<vmem>>, vector<1x128xf32>
        %56 = vector.broadcast %54 : vector<8x1xf32> to vector<8x128xf32>
        %57 = arith.addf %53, %56 : vector<8x128xf32>
        %58 = vector.broadcast %55 : vector<1x128xf32> to vector<8x128xf32>
        %59 = arith.addf %57, %58 : vector<8x128xf32>
        %cst_45 = arith.constant dense<0xFF800000> : vector<8xf32>
        %60 = vector.multi_reduction <maximumf>, %59, %cst_45 [1] : vector<8x128xf32> to vector<8xf32>
        %61 = vector.shape_cast %60 : vector<8xf32> to vector<8x1xf32>
        %62 = vector.broadcast %61 : vector<8x1xf32> to vector<8x128xf32>
        %63 = arith.subf %59, %62 : vector<8x128xf32>
        %64 = math.exp %63 : vector<8x128xf32>
        %cst_46 = arith.constant dense<0.000000e+00> : vector<8xf32>
        %65 = vector.multi_reduction <add>, %64, %cst_46 [1] : vector<8x128xf32> to vector<8xf32>
        %66 = vector.shape_cast %65 : vector<8xf32> to vector<8x1xf32>
        %67 = math.log %66 : vector<8x1xf32>
        %68 = arith.addf %61, %67 : vector<8x1xf32>
        %69 = vector.broadcast %cst_24 : f32 to vector<8x1xf32>
        %70 = arith.subf %69, %68 : vector<8x1xf32>
        %71 = arith.addf %70, %54 : vector<8x1xf32>
        %72 = vector.broadcast %71 : vector<8x1xf32> to vector<8x128xf32>
        %73 = arith.addf %53, %72 : vector<8x128xf32>
        %74 = vector.broadcast %55 : vector<1x128xf32> to vector<8x128xf32>
        %75 = arith.addf %73, %74 : vector<8x128xf32>
        %cst_47 = arith.constant dense<0xFF800000> : vector<128xf32>
        %76 = vector.multi_reduction <maximumf>, %75, %cst_47 [0] : vector<8x128xf32> to vector<128xf32>
        %77 = vector.shape_cast %76 : vector<128xf32> to vector<1x128xf32>
        %78 = vector.broadcast %77 : vector<1x128xf32> to vector<8x128xf32>
        %79 = arith.subf %75, %78 : vector<8x128xf32>
        %80 = math.exp %79 : vector<8x128xf32>
        %cst_48 = arith.constant dense<0.000000e+00> : vector<128xf32>
        %81 = vector.multi_reduction <add>, %80, %cst_48 [0] : vector<8x128xf32> to vector<128xf32>
        %82 = vector.shape_cast %81 : vector<128xf32> to vector<1x128xf32>
        %83 = math.log %82 : vector<1x128xf32>
        %84 = arith.addf %77, %83 : vector<1x128xf32>
        %85 = vector.broadcast %cst_25 : f32 to vector<1x128xf32>
        %86 = arith.subf %85, %84 : vector<1x128xf32>
        %87 = arith.addf %86, %55 : vector<1x128xf32>
        %cst_49 = arith.constant 0.000000e+00 : f32
        %88 = vector.broadcast %cst_49 : f32 to vector<1x128xf32>
        %89 = arith.select %24, %87, %88 : vector<1x128xi1>, vector<1x128xf32>
        %c0_50 = arith.constant 0 : index
        %c0_51 = arith.constant 0 : index
        %90 = vector.load %arg5[%c0_50, %c0_51] : memref<8x1xf32, #tpu.memory_space<vmem>>, vector<8x1xf32>
        tpu.vector_store %arg5[%c0_50, %c0_51], %71 {strides = array<i32>} : memref<8x1xf32, #tpu.memory_space<vmem>>, vector<8x1xf32>,
        %c0_52 = arith.constant 0 : index
        %c0_53 = arith.constant 0 : index
        %91 = vector.load %arg6[%c0_52, %c0_53] : memref<1x128xf32, #tpu.memory_space<vmem>>, vector<1x128xf32>
        tpu.vector_store %arg6[%c0_52, %c0_53], %89 {strides = array<i32>} : memref<1x128xf32, #tpu.memory_space<vmem>>, vector<1x128xf32>,
        %92 = arith.subf %71, %54 : vector<8x1xf32>
        %93 = math.absf %92 : vector<8x1xf32>
        %cst_54 = arith.constant dense<0.000000e+00> : vector<1xf32>
        %94 = vector.multi_reduction <add>, %93, %cst_54 [0] : vector<8x1xf32> to vector<1xf32>
        %95 = vector.shape_cast %94 : vector<1xf32> to vector<1x1xf32>
        %96 = vector.broadcast %cst_26 : f32 to vector<1x1xf32>
        %97 = arith.mulf %96, %95 : vector<1x1xf32>
        %c0_55 = arith.constant 0 : index
        %c0_56 = arith.constant 0 : index
        %98 = vector.load %arg7[%c0_55, %c0_56] : memref<1x1xf32, #tpu.memory_space<vmem>>, vector<1x1xf32>
        tpu.vector_store %arg7[%c0_55, %c0_56], %97 {strides = array<i32>} : memref<1x1xf32, #tpu.memory_space<vmem>>, vector<1x1xf32>,
      } else {
      }
    }
    %c0_27 = arith.constant 0 : index
    %c0_28 = arith.constant 0 : index
    %37 = vector.load %arg4[%c0_27, %c0_28] : memref<8x128xf32, #tpu.memory_space<vmem>>, vector<8x128xf32>
    %c0_29 = arith.constant 0 : index
    %c0_30 = arith.constant 0 : index
    %38 = vector.load %arg5[%c0_29, %c0_30] : memref<8x1xf32, #tpu.memory_space<vmem>>, vector<8x1xf32>
    %39 = vector.broadcast %38 : vector<8x1xf32> to vector<8x128xf32>
    %40 = arith.addf %37, %39 : vector<8x128xf32>
    %c0_31 = arith.constant 0 : index
    %c0_32 = arith.constant 0 : index
    %41 = vector.load %arg6[%c0_31, %c0_32] : memref<1x128xf32, #tpu.memory_space<vmem>>, vector<1x128xf32>
    %42 = vector.broadcast %41 : vector<1x128xf32> to vector<8x128xf32>
    %43 = arith.addf %40, %42 : vector<8x128xf32>
    %44 = math.exp %43 : vector<8x128xf32>
    %c0_33 = arith.constant 0 : index
    %c0_34 = arith.constant 0 : index
    %c0_35 = arith.constant 0 : index
    %45 = vector.load %arg3[%c0_33, %c0_34, %c0_35] : memref<1x8x128xf32, #tpu.memory_space<vmem>>, vector<1x8x128xf32>
    %46 = vector.shape_cast %45 : vector<1x8x128xf32> to vector<8x128xf32>
    %47 = vector.shape_cast %44 : vector<8x128xf32> to vector<1x8x128xf32>
    tpu.vector_store %arg3[%c0_33, %c0_34, %c0_35], %47 {strides = array<i32>} : memref<1x8x128xf32, #tpu.memory_space<vmem>>, vector<1x8x128xf32>,
    return
  }
  func.func @transform_0(%arg0: i32) -> (i32, i32, i32) {
    %c0_i32 = arith.constant 0 : i32
    %c0_i32_0 = arith.constant 0 : i32
    %c0_i32_1 = arith.constant 0 : i32
    return %arg0, %c0_i32, %c0_i32_0 : i32, i32, i32
  }
  func.func @transform_1(%arg0: i32) -> (i32, i32, i32) {
    %c0_i32 = arith.constant 0 : i32
    %c0_i32_0 = arith.constant 0 : i32
    %c0_i32_1 = arith.constant 0 : i32
    return %arg0, %c0_i32, %c0_i32_0 : i32, i32, i32
  }
  func.func @transform_2(%arg0: i32) -> (i32, i32, i32) {
    %c0_i32 = arith.constant 0 : i32
    %c0_i32_0 = arith.constant 0 : i32
    %c0_i32_1 = arith.constant 0 : i32
    return %arg0, %c0_i32, %c0_i32_0 : i32, i32, i32
  }
}

</mosaic_0001>

<llo_original>
// kernel: tpu_custom_call.1
$region0: #{tpu_custom_call.1}
  #allocation0 [shape = 'u32[]', space=smem, size = 0x4, offset = 0x4, fixed_abs, tag = 'smem constant byte address 0x4 - core index']
  #allocation1 [shape = 'u32[144,128]{1,0:T(1,128)}', space=vmem, size = 0x12000, scoped, tag = 'internal scratch']
  #allocation2 [shape = 'f32[8,128]{1,0:T(8,128)}', space=vmem, size = 0x1000, scoped, tag = 'scratch operand']
  #allocation3 [shape = 'f32[8,1]{1,0:T(8,128)}', space=vmem, size = 0x1000, scoped, tag = 'scratch operand']
  #allocation4 [shape = 'f32[1,128]{1,0:T(1,128)}', space=vmem, size = 0x200, scoped, tag = 'scratch operand']
  #allocation5 [shape = 'f32[1,1]{1,0:T(1,128)}', space=vmem, size = 0x200, scoped, tag = 'scratch operand']
  %s0 = inlined_call_operand.hbm [shape: f32[2,8,128], index: 0, kind: input, shape index: {}]
  %s1 = inlined_call_operand.hbm [shape: f32[2,128,128], index: 1, kind: input, shape index: {}]
  %s2 = inlined_call_operand.hbm [shape: f32[2,8,128], index: 2, kind: output, shape index: {}]
  %s3 = sld [smem:[#allocation0]]
  $region60: #{tpu_custom_call.1} parent=0
    _
  %s5 = ssub.s32 1, %s3
  %s6 = scalar_select 0, %s5, %s3
  $region1: #{tpu_custom_call.1} parent=0
    #allocation6 [shape = 'u8[8192]{0}', space=vmem, size = 0x2000, scoped, tag = 'input window, operand 0']
    #allocation7 [shape = 's32[2]{0}', space=sflag, size = 0x8, scoped, tag = 'scoped memory for tpu_custom_call.1']
    #allocation8 [shape = 's32[2]{0}', space=sflag, size = 0x8, scoped, tag = 'scoped memory for tpu_custom_call.1']
    #allocation9 [shape = 'u8[131072]{0}', space=vmem, size = 0x20000, scoped, tag = 'input window, operand 1']
    #allocation10 [shape = 's32[2]{0}', space=sflag, size = 0x8, scoped, tag = 'scoped memory for tpu_custom_call.1']
    #allocation11 [shape = 'u8[8192]{0}', space=vmem, size = 0x2000, scoped, tag = 'output window, operand 0']
    %7 = vsyncpa [#allocation7], 0
    %s8 = scalar_lea.sflag [#allocation7], 1
    %9 = vsyncpa %s8, 0
    %10 = vsyncpa [#allocation10], 0
    %s11 = scalar_lea.sflag [#allocation10], 1
    %12 = vsyncpa %s11, 0
    %13 = vsyncpa [#allocation8], 0
    %s14 = scalar_lea.sflag [#allocation8], 1
    %15 = vsyncpa %s14, 0
    loop: start=0, step=1, limit=4
    $region2: #{tpu_custom_call.1} parent=1 // loop_pre_header
      _
    $region3: #{tpu_custom_call.1} parent=1 // loop_header
      %s17 = sphi 0, %s21
      %p18 = scmp.ge.s32.totalorder %s17, 4
      %s27 = sphi 0, %s29
      %s30 = sphi 0, %s27
      %s31 = sphi 0, %s30
      %s47 = sphi 0, %s31
      %s53 = sphi 0, %s55
      %s56 = sphi 0, %s53
      %s57 = sphi 0, %s56
      %s73 = sphi 0, %s57
      %s79 = sphi 0, %s81
      %s82 = sphi 0, %s79
      %s83 = sphi 0, %s82
      %s99 = sphi 0, %s83
    $region4: #{tpu_custom_call.1} parent=1 // loop_header_branch
      %20 = sbr.rel (%p18) target = $region8
    $region5: #{tpu_custom_call.1} parent=1 // loop_body
      %s22 = ssub.s32 %s17, 1
      %s23 = ssub.s32 %s17, 2
      %s24 = sadd.s32 %s17, 1
      %s25 = ssub.s32 %s17, %s24
      %p26 = scmp.eq.s32.totalorder %s25, 0
      %s28 = sadd.s32 %s27, 1
      %s29 = scalar_select %p26, %s27, %s28
      %p32 = pneg %p26
      %p33 = scmp.eq.s32.totalorder %s17, 1
      %p34 = por %p32, %p33
      %p35 = scmp.ne.s32.totalorder %s27, %s30
      %p36 = scmp.eq.s32.totalorder %s17, 0
      %p37 = por %p35, %p36
      %p38 = scmp.ne.s32.totalorder %s27, %s30
      %p39 = scmp.eq.s32.totalorder %s22, 1
      %p40 = por %p38, %p39
      %p41 = scmp.ne.s32.totalorder %s30, %s31
      %p42 = scmp.eq.s32.totalorder %s22, 0
      %p43 = por %p41, %p42
      %p44 = scmp.ne.s32.totalorder %s30, %s31
      %p45 = scmp.eq.s32.totalorder %s23, 1
      %p46 = por %p44, %p45
      %p48 = scmp.ne.s32.totalorder %s31, %s47
      %p49 = scmp.eq.s32.totalorder %s23, 0
      %p50 = por %p48, %p49
      %s51 = ssub.s32 %s17, %s24
      %p52 = scmp.eq.s32.totalorder %s51, 0
      %s54 = sadd.s32 %s53, 1
      %s55 = scalar_select %p52, %s53, %s54
      %p58 = pneg %p52
      %p59 = scmp.eq.s32.totalorder %s17, 1
      %p60 = por %p58, %p59
      %p61 = scmp.ne.s32.totalorder %s53, %s56
      %p62 = scmp.eq.s32.totalorder %s17, 0
      %p63 = por %p61, %p62
      %p64 = scmp.ne.s32.totalorder %s53, %s56
      %p65 = scmp.eq.s32.totalorder %s22, 1
      %p66 = por %p64, %p65
      %p67 = scmp.ne.s32.totalorder %s56, %s57
      %p68 = scmp.eq.s32.totalorder %s22, 0
      %p69 = por %p67, %p68
      %p70 = scmp.ne.s32.totalorder %s56, %s57
      %p71 = scmp.eq.s32.totalorder %s23, 1
      %p72 = por %p70, %p71
      %p74 = scmp.ne.s32.totalorder %s57, %s73
      %p75 = scmp.eq.s32.totalorder %s23, 0
      %p76 = por %p74, %p75
      %s77 = ssub.s32 %s17, %s24
      %p78 = scmp.eq.s32.totalorder %s77, 0
      %s80 = sadd.s32 %s79, 1
      %s81 = scalar_select %p78, %s79, %s80
      %p84 = pneg %p78
      %p85 = scmp.eq.s32.totalorder %s17, 1
      %p86 = por %p84, %p85
      %p87 = scmp.ne.s32.totalorder %s79, %s82
      %p88 = scmp.eq.s32.totalorder %s17, 0
      %p89 = por %p87, %p88
      %p90 = scmp.ne.s32.totalorder %s79, %s82
      %p91 = scmp.eq.s32.totalorder %s22, 1
      %p92 = por %p90, %p91
      %p93 = scmp.ne.s32.totalorder %s82, %s83
      %p94 = scmp.eq.s32.totalorder %s22, 0
      %p95 = por %p93, %p94
      %p96 = scmp.ne.s32.totalorder %s82, %s83
      %p97 = scmp.eq.s32.totalorder %s23, 1
      %p98 = por %p96, %p97
      %p100 = scmp.ne.s32.totalorder %s83, %s99
      %p101 = scmp.eq.s32.totalorder %s23, 0
      %p102 = por %p100, %p101
      %p103 = scmp.le.s32.totalorder 1, %s17
      %p104 = scmp.lt.s32.totalorder %s17, 3
      %p105 = pnand %p103, %p104
      %p106 = pneg %p105
      // Predicated region
      $region9: #{tpu_custom_call.1} parent=5 // pred_check
        _
      $region10: #{tpu_custom_call.1} parent=5 // pred_check_branch
        %108 = sbr.rel (%p105) target = $region12
      $region11: #{tpu_custom_call.1} parent=5 // pred_region
        %s109 = ssub.s32 %s17, 1
      $region12: #{tpu_custom_call.1} parent=5 // pred_fallthru
        _
      %p110 = scmp.lt.s32.totalorder %s17, 2
      // Predicated region
      $region13: #{tpu_custom_call.1} parent=5 // pred_check
        %p111 = pneg %p110
      $region14: #{tpu_custom_call.1} parent=5 // pred_check_branch
        %113 = sbr.rel (%p111) target = $region16
      $region15: #{tpu_custom_call.1} parent=5 // pred_region
        // Predicated region
        $region17: #{tpu_custom_call.1} parent=15 // pred_check
          %p114 = pneg %p37
        $region18: #{tpu_custom_call.1} parent=15 // pred_check_branch
          %116 = sbr.rel (%p114) target = $region20
        $region19: #{tpu_custom_call.1} parent=15 // pred_region
          %s117 = sand.u32 %s27, 1
          %s118 = scalar_lea.sflag [#allocation7], %s117
          %s119 = sand.u32 %s27, 1
          %s120 = smul.addr %s119, 8
          %s121 = scalar_lea.vmem [#allocation6], %s120
          %s123 = ssub.s32 128, 128
          %124 = vsyncadd %s118, %s123
          %s125 = smul.addr %s17, 128
          %s126 = scalar_lea.hbm %s0, %s125
          %s128 = sshll.u32 %s121, 4
          %s129 = int_to_ptr.vmem [resolvable:$true] %s128
          %131 = dma.hbm_to_vmem [thread:$0]  %s126, 128, %s129, %s118
        $region20: #{tpu_custom_call.1} parent=15 // pred_fallthru
          _
        // Predicated region
        $region21: #{tpu_custom_call.1} parent=15 // pred_check
          %p132 = pneg %p63
        $region22: #{tpu_custom_call.1} parent=15 // pred_check_branch
          %134 = sbr.rel (%p132) target = $region24
        $region23: #{tpu_custom_call.1} parent=15 // pred_region
          %s135 = sand.u32 %s53, 1
          %s136 = scalar_lea.sflag [#allocation10], %s135
          %s137 = sand.u32 %s53, 1
          %s138 = smul.addr %s137, 128
          %s139 = scalar_lea.vmem [#allocation9], %s138
          %s141 = ssub.s32 2048, 2048
          %142 = vsyncadd %s136, %s141
          %s143 = smul.addr %s17, 16
          %s144 = smul.addr %s143, 128
          %s145 = scalar_lea.hbm %s1, %s144
          %s146 = sshll.u32 %s139, 4
          %s147 = int_to_ptr.vmem [resolvable:$true] %s146
          %152 = dma.hbm_to_vmem [thread:$0]  %s145, 2048, %s147, %s136, 128, 128, 8
        $region24: #{tpu_custom_call.1} parent=15 // pred_fallthru
          _
      $region16: #{tpu_custom_call.1} parent=5 // pred_fallthru
        _
      %p153 = scmp.le.s32.totalorder 1, %s17
      %p154 = scmp.lt.s32.totalorder %s17, 3
      %p155 = pnand %p153, %p154
      %p156 = pneg %p155
      // Predicated region
      $region25: #{tpu_custom_call.1} parent=5 // pred_check
        _
      $region26: #{tpu_custom_call.1} parent=5 // pred_check_branch
        %158 = sbr.rel (%p155) target = $region28
      $region27: #{tpu_custom_call.1} parent=5 // pred_region
        %s159 = ssub.s32 %s17, 1
        %s160 = sand.u32 %s30, 1
        %s161 = scalar_lea.sflag [#allocation7], %s160
        %s162 = sand.u32 %s30, 1
        %s163 = smul.addr %s162, 8
        %s164 = scalar_lea.vmem [#allocation6], %s163
        // Predicated region
        $region29: #{tpu_custom_call.1} parent=27 // pred_check
          %p165 = pneg %p43
        $region30: #{tpu_custom_call.1} parent=27 // pred_check_branch
          %167 = sbr.rel (%p165) target = $region32
        $region31: #{tpu_custom_call.1} parent=27 // pred_region
          %168 = dma.done %s161, 128
        $region32: #{tpu_custom_call.1} parent=27 // pred_fallthru
          _
        %s169 = sand.u32 %s56, 1
        %s170 = scalar_lea.sflag [#allocation10], %s169
        %s171 = sand.u32 %s56, 1
        %s172 = smul.addr %s171, 128
        %s173 = scalar_lea.vmem [#allocation9], %s172
        // Predicated region
        $region33: #{tpu_custom_call.1} parent=27 // pred_check
          %p174 = pneg %p69
        $region34: #{tpu_custom_call.1} parent=27 // pred_check_branch
          %176 = sbr.rel (%p174) target = $region36
        $region35: #{tpu_custom_call.1} parent=27 // pred_region
          %177 = dma.done %s170, 2048
        $region36: #{tpu_custom_call.1} parent=27 // pred_fallthru
          _
        %s178 = sand.u32 %s30, 1
        %s179 = scalar_lea.sflag [#allocation7], %s178
        %s180 = sand.u32 %s30, 1
        %s181 = smul.addr %s180, 8
        %s182 = scalar_lea.vmem [#allocation6], %s181
        %p183 = pneg %p43
        %p184 = pneg %p40
        %s185 = sand.u32 %s56, 1
        %s186 = scalar_lea.sflag [#allocation10], %s185
        %s187 = sand.u32 %s56, 1
        %s188 = smul.addr %s187, 128
        %s189 = scalar_lea.vmem [#allocation9], %s188
        %p190 = pneg %p69
        %p191 = pneg %p66
        %p192 = pneg %p95
        %p193 = pneg %p92
        %s194 = sand.u32 %s82, 1
        %s195 = scalar_lea.sflag [#allocation8], %s194
        %s196 = sand.u32 %s82, 1
        %s197 = smul.addr %s196, 8
        %s198 = scalar_lea.vmem [#allocation11], %s197
        %v199 = vld [vmem:[%s164] sm:$0xff]
        %v200 = vld [vmem:[%s173] sm:$0xff]
        %v201 = vld [vmem:[%s173 + $0x8] sm:$0xff]
        %v202 = vld [vmem:[%s173 + $0x10] sm:$0xff]
        %v203 = vld [vmem:[%s173 + $0x18] sm:$0xff]
        %v204 = vld [vmem:[%s173 + $0x20] sm:$0xff]
        %v205 = vld [vmem:[%s173 + $0x28] sm:$0xff]
        %v206 = vld [vmem:[%s173 + $0x30] sm:$0xff]
        %v207 = vld [vmem:[%s173 + $0x38] sm:$0xff]
        %v208 = vld [vmem:[%s173 + $0x40] sm:$0xff]
        %v209 = vld [vmem:[%s173 + $0x48] sm:$0xff]
        %v210 = vld [vmem:[%s173 + $0x50] sm:$0xff]
        %v211 = vld [vmem:[%s173 + $0x58] sm:$0xff]
        %v212 = vld [vmem:[%s173 + $0x60] sm:$0xff]
        %v213 = vld [vmem:[%s173 + $0x68] sm:$0xff]
        %v214 = vld [vmem:[%s173 + $0x70] sm:$0xff]
        %v215 = vld [vmem:[%s173 + $0x78] sm:$0xff]
        %v216 = vmul.f32 %v199, %v199
        %217 = vadd.xlane.f32.xlu0 %v216
        %v218 = vpop.xlane.xlu0 %217
        %v219 = vmul.f32 %v200, %v200
        %v220 = vmul.f32 %v201, %v201
        %v221 = vmul.f32 %v202, %v202
        %v222 = vmul.f32 %v203, %v203
        %v223 = vmul.f32 %v204, %v204
        %v224 = vmul.f32 %v205, %v205
        %v225 = vmul.f32 %v206, %v206
        %v226 = vmul.f32 %v207, %v207
        %v227 = vmul.f32 %v208, %v208
        %v228 = vmul.f32 %v209, %v209
        %v229 = vmul.f32 %v210, %v210
        %v230 = vmul.f32 %v211, %v211
        %v231 = vmul.f32 %v212, %v212
        %v232 = vmul.f32 %v213, %v213
        %v233 = vmul.f32 %v214, %v214
        %v234 = vmul.f32 %v215, %v215
        %235 = vadd.xlane.f32.xlu0 %v219
        %v236 = vpop.xlane.xlu0 %235
        %237 = vadd.xlane.f32.xlu0 %v220
        %v238 = vpop.xlane.xlu0 %237
        %239 = vadd.xlane.f32.xlu0 %v221
        %v240 = vpop.xlane.xlu0 %239
        %241 = vadd.xlane.f32.xlu0 %v222
        %v242 = vpop.xlane.xlu0 %241
        %243 = vadd.xlane.f32.xlu0 %v223
        %v244 = vpop.xlane.xlu0 %243
        %245 = vadd.xlane.f32.xlu0 %v224
        %v246 = vpop.xlane.xlu0 %245
        %247 = vadd.xlane.f32.xlu0 %v225
        %v248 = vpop.xlane.xlu0 %247
        %249 = vadd.xlane.f32.xlu0 %v226
        %v250 = vpop.xlane.xlu0 %249
        %251 = vadd.xlane.f32.xlu0 %v227
        %v252 = vpop.xlane.xlu0 %251
        %253 = vadd.xlane.f32.xlu0 %v228
        %v254 = vpop.xlane.xlu0 %253
        %255 = vadd.xlane.f32.xlu0 %v229
        %v256 = vpop.xlane.xlu0 %255
        %257 = vadd.xlane.f32.xlu0 %v230
        %v258 = vpop.xlane.xlu0 %257
        %259 = vadd.xlane.f32.xlu0 %v231
        %v260 = vpop.xlane.xlu0 %259
        %261 = vadd.xlane.f32.xlu0 %v232
        %v262 = vpop.xlane.xlu0 %261
        %263 = vadd.xlane.f32.xlu0 %v233
        %v264 = vpop.xlane.xlu0 %263
        %265 = vadd.xlane.f32.xlu0 %v234
        %v266 = vpop.xlane.xlu0 %265
        %267 = vmatprep.subr.mxu0 0.0
        %268 = vmatpush1.xpose.msra.mxu0 %v215
        %269 = vmatprep.subr.mxu0 0.0
        %270 = vmatpush1.xpose.msra.mxu0 %v214
        %271 = vmatprep.subr.mxu0 0.0
        %272 = vmatpush1.xpose.msra.mxu0 %v213
        %273 = vmatprep.subr.mxu0 0.0
        %274 = vmatpush1.xpose.msra.mxu0 %v212
        %275 = vmatprep.subr.mxu0 0.0
        %276 = vmatpush1.xpose.msra.mxu0 %v211
        %277 = vmatprep.subr.mxu0 0.0
        %278 = vmatpush1.xpose.msra.mxu0 %v210
        %279 = vmatprep.subr.mxu0 0.0
        %280 = vmatpush1.xpose.msra.mxu0 %v209
        %281 = vmatprep.subr.mxu0 0.0
        %282 = vmatpush1.xpose.msra.mxu0 %v208
        %283 = vmatprep.subr.mxu0 0.0
        %284 = vmatpush1.xpose.msra.mxu0 %v207
        %285 = vmatprep.subr.mxu0 0.0
        %286 = vmatpush1.xpose.msra.mxu0 %v206
        %287 = vmatprep.subr.mxu0 0.0
        %288 = vmatpush1.xpose.msra.mxu0 %v205
        %289 = vmatprep.subr.mxu0 0.0
        %290 = vmatpush1.xpose.msra.mxu0 %v204
        %291 = vmatprep.subr.mxu0 0.0
        %292 = vmatpush1.xpose.msra.mxu0 %v203
        %293 = vmatprep.subr.mxu0 0.0
        %294 = vmatpush1.xpose.msra.mxu0 %v202
        %295 = vmatprep.subr.mxu0 0.0
        %296 = vmatpush1.xpose.msra.mxu0 %v201
        %297 = vmatprep.subr.mxu0 0.0
        %298 = vmatpush1.xpose.msra.mxu0 %v200
        %299 = vmatprep.subr.mxu0 0.0
        %300 = vmatpush2.xpose.msra.mxu0 0.0
        %301 = vmatprep.subr.mxu0 0.0
        %302 = vmatpush2.xpose.msra.mxu0 0.0
        %303 = vmatprep.subr.mxu0 0.0
        %304 = vmatpush2.xpose.msra.mxu0 0.0
        %305 = vmatprep.subr.mxu0 0.0
        %306 = vmatpush2.xpose.msra.mxu0 0.0
        %307 = vmatprep.subr.mxu0 0.0
        %308 = vmatpush2.xpose.msra.mxu0 0.0
        %309 = vmatprep.subr.mxu0 0.0
        %310 = vmatpush2.xpose.msra.mxu0 0.0
        %311 = vmatprep.subr.mxu0 0.0
        %312 = vmatpush2.xpose.msra.mxu0 0.0
        %313 = vmatprep.subr.mxu0 0.0
        %314 = vmatpush2.xpose.msra.mxu0 0.0
        %315 = vmatprep.subr.mxu0 0.0
        %316 = vmatpush2.xpose.msra.mxu0 0.0
        %317 = vmatprep.subr.mxu0 0.0
        %318 = vmatpush2.xpose.msra.mxu0 0.0
        %319 = vmatprep.subr.mxu0 0.0
        %320 = vmatpush2.xpose.msra.mxu0 0.0
        %321 = vmatprep.subr.mxu0 0.0
        %322 = vmatpush2.xpose.msra.mxu0 0.0
        %323 = vmatprep.subr.mxu0 0.0
        %324 = vmatpush2.xpose.msra.mxu0 0.0
        %325 = vmatprep.subr.mxu0 0.0
        %326 = vmatpush2.xpose.msra.mxu0 0.0
        %327 = vmatprep.subr.mxu0 0.0
        %328 = vmatpush2.xpose.msra.mxu0 0.0
        %329 = vmatprep.subr.mxu0 0.0
        %330 = vmatpush2.xpose.msra.mxu0 0.0
        %331 = vmatprep.mubr.f32.mxu0 0.0
        %332 = vmatmul.mubr.f32.gmra.mxu0 %v199
        %v333 = vpop.f32.mrf.mxu0
        %v334 = vadd.f32 0.0, %v333
        %v335 = vpop.f32.mrf.mxu0
        %336 = vdwg.mxu0
        %v353 = vlaneseq
        %v354 = vand.u32 %v353, 127
        %v355 = vlaneseq
        %v356 = vshrl.u32 %v355, 7
        %v357 = vsub.s32 %v354, %v356
        %v358 = vrot.slane %v236, %v357
        %v359 = vadd.s32 %v354, 4294967288
        %v360 = vlaneseq
        %v361 = vshrl.u32 %v360, 7
        %v362 = vsub.s32 %v359, %v361
        %v363 = vrot.slane %v238, %v362
        %vm364 = vcmask 130112
        %v365 = vsel %vm364, %v363, %v358
        %v366 = vadd.s32 %v354, 4294967280
        %v367 = vlaneseq
        %v368 = vshrl.u32 %v367, 7
        %v369 = vsub.s32 %v366, %v368
        %v370 = vrot.slane %v240, %v369
        %vm371 = vcmask 195712
        %v372 = vsel %vm371, %v370, %v365
        %v373 = vadd.s32 %v354, 4294967272
        %v374 = vlaneseq
        %v375 = vshrl.u32 %v374, 7
        %v376 = vsub.s32 %v373, %v375
        %v377 = vrot.slane %v242, %v376
        %vm378 = vcmask 261312
        %v379 = vsel %vm378, %v377, %v372
        %v380 = vadd.s32 %v354, 4294967264
        %v381 = vlaneseq
        %v382 = vshrl.u32 %v381, 7
        %v383 = vsub.s32 %v380, %v382
        %v384 = vrot.slane %v244, %v383
        %vm385 = vcmask 326912
        %v386 = vsel %vm385, %v384, %v379
        %v387 = vadd.s32 %v354, 4294967256
        %v388 = vlaneseq
        %v389 = vshrl.u32 %v388, 7
        %v390 = vsub.s32 %v387, %v389
        %v391 = vrot.slane %v246, %v390
        %vm392 = vcmask 392512
        %v393 = vsel %vm392, %v391, %v386
        %v394 = vadd.s32 %v354, 4294967248
        %v395 = vlaneseq
        %v396 = vshrl.u32 %v395, 7
        %v397 = vsub.s32 %v394, %v396
        %v398 = vrot.slane %v248, %v397
        %vm399 = vcmask 458112
        %v400 = vsel %vm399, %v398, %v393
        %v401 = vadd.s32 %v354, 4294967240
        %v402 = vlaneseq
        %v403 = vshrl.u32 %v402, 7
        %v404 = vsub.s32 %v401, %v403
        %v405 = vrot.slane %v250, %v404
        %vm406 = vcmask 523712
        %v407 = vsel %vm406, %v405, %v400
        %v408 = vadd.s32 %v354, 4294967232
        %v409 = vlaneseq
        %v410 = vshrl.u32 %v409, 7
        %v411 = vsub.s32 %v408, %v410
        %v412 = vrot.slane %v252, %v411
        %vm413 = vcmask 589312
        %v414 = vsel %vm413, %v412, %v407
        %v415 = vadd.s32 %v354, 4294967224
        %v416 = vlaneseq
        %v417 = vshrl.u32 %v416, 7
        %v418 = vsub.s32 %v415, %v417
        %v419 = vrot.slane %v254, %v418
        %vm420 = vcmask 654912
        %v421 = vsel %vm420, %v419, %v414
        %v422 = vadd.s32 %v354, 4294967216
        %v423 = vlaneseq
        %v424 = vshrl.u32 %v423, 7
        %v425 = vsub.s32 %v422, %v424
        %v426 = vrot.slane %v256, %v425
        %vm427 = vcmask 720512
        %v428 = vsel %vm427, %v426, %v421
        %v429 = vadd.s32 %v354, 4294967208
        %v430 = vlaneseq
        %v431 = vshrl.u32 %v430, 7
        %v432 = vsub.s32 %v429, %v431
        %v433 = vrot.slane %v258, %v432
        %vm434 = vcmask 786112
        %v435 = vsel %vm434, %v433, %v428
        %v436 = vadd.s32 %v354, 4294967200
        %v437 = vlaneseq
        %v438 = vshrl.u32 %v437, 7
        %v439 = vsub.s32 %v436, %v438
        %v440 = vrot.slane %v260, %v439
        %vm441 = vcmask 851712
        %v442 = vsel %vm441, %v440, %v435
        %v443 = vadd.s32 %v354, 4294967192
        %v444 = vlaneseq
        %v445 = vshrl.u32 %v444, 7
        %v446 = vsub.s32 %v443, %v445
        %v447 = vrot.slane %v262, %v446
        %vm448 = vcmask 917312
        %v449 = vsel %vm448, %v447, %v442
        %v450 = vadd.s32 %v354, 4294967184
        %v451 = vlaneseq
        %v452 = vshrl.u32 %v451, 7
        %v453 = vsub.s32 %v450, %v452
        %v454 = vrot.slane %v264, %v453
        %vm455 = vcmask 982912
        %v456 = vsel %vm455, %v454, %v449
        %v457 = vadd.s32 %v354, 4294967176
        %v458 = vlaneseq
        %v459 = vshrl.u32 %v458, 7
        %v460 = vsub.s32 %v457, %v459
        %v461 = vrot.slane %v266, %v460
        %vm462 = vcmask 1048512
        %v463 = vsel %vm462, %v461, %v456
        %vm464 = vcmask 1042434
        %v465 = vsel %vm464, %v463, %v463
        %vm466 = vcmask 1043459
        %v467 = vsel %vm466, %v463, %v465
        %vm468 = vcmask 1044484
        %v469 = vsel %vm468, %v463, %v467
        %vm470 = vcmask 1045509
        %v471 = vsel %vm470, %v463, %v469
        %vm472 = vcmask 1046534
        %v473 = vsel %vm472, %v463, %v471
        %vm474 = vcmask 1047559
        %v475 = vsel %vm474, %v463, %v473
        %v477 = vadd.f32 %v218, %v475
        %v478 = vmul.f32 %v334, 2.0
        %v479 = vsub.f32 %v477, %v478
        %v480 = vmax.f32 %v479, 0.0
        %v481 = vmul.f32 %v480, -10.0
        %vm482 = vcmp.lt.s32.totalorder %v354, 8
        %v483 = vsel %vm482, 1, 0
        %vm484 = vcmp.eq.s32.totalorder %v483, 1
        %v485 = vsel %vm484, %v481, -1e+30
        %486 = vst [vmem:[#allocation2] sm:$0xff] %v485
        %vm487 = vcmask 7168
        %488 = vst.msk [vmem:[#allocation3] sm:$0xff] %vm487, 0.0
        %489 = vst [vmem:[#allocation4] sm:$0x1] 0.0
        %vm490 = vcmask 0
        %491 = vst.msk [vmem:[#allocation5] sm:$0x1] %vm490, 1e+30
        loop: start=0, step=1, limit=100
        $region37: #{tpu_custom_call.1} parent=27 // loop_pre_header
          _
        $region38: #{tpu_custom_call.1} parent=27 // loop_header
          %s493 = sphi 0, %s497
          %p494 = scmp.ge.s32.totalorder %s493, 100
        $region39: #{tpu_custom_call.1} parent=27 // loop_header_branch
          %496 = sbr.rel (%p494) target = $region43
        $region40: #{tpu_custom_call.1} parent=27 // loop_body
          %v498 = vld [vmem:[#allocation5] sm:$0x1]
          %s499 = vtos %v498
          %p500 = scmp.ge.f32.partialorder %s499, 0.1
          // Predicated region
          $region44: #{tpu_custom_call.1} parent=40 // pred_check
            %p501 = pneg %p500
          $region45: #{tpu_custom_call.1} parent=40 // pred_check_branch
            %503 = sbr.rel (%p501) target = $region47
          $region46: #{tpu_custom_call.1} parent=40 // pred_region
            %v504 = vld [vmem:[#allocation2] sm:$0xff]
            %v505 = vld [vmem:[#allocation3] sm:$0xff]
            %v506 = vld [vmem:[#allocation4] sm:$0x1]
            %508 = vset.pattern.permute.xlu0 0
            %509 = vperm.xlu0 %508, %v505
            %v510 = vpop.permute.xlu0 %509
            %v512 = vadd.f32 %v504, %v510
            %v514 = vlaneseq
            %v515 = vshrl.u32 %v514, 7
            %v516 = vsub.s32 0, %v515
            %v517 = vrot.slane %v506, %v516
            %v519 = vadd.f32 %v512, %v517
            %520 = vmax.xlane.f32.xlu0 %v519
            %v521 = vpop.xlane.xlu0 %520
            %v522 = vsub.f32 %v519, %v521
            %v523 = vmul.f32 %v522, 1.442695
            %v524 = vpow.pop %v523
            %525 = vadd.xlane.f32.xlu0 %v524
            %v526 = vpop.xlane.xlu0 %525
            %v527 = vlog2.pop %v526
            %v528 = vmul.f32 %v527, 0.6931472
            %v529 = vadd.f32 %v521, %v528
            %v530 = vsub.f32 -2.0794415, %v529
            %v531 = vadd.f32 %v530, %v505
            %533 = vset.pattern.permute.xlu0 0
            %534 = vperm.xlu0 %533, %v531
            %v535 = vpop.permute.xlu0 %534
            %v537 = vadd.f32 %v504, %v535
            %v538 = vadd.f32 %v537, %v517
            %v539 = vrot.slane %v538, 4
            %v540 = vmax.f32 %v538, %v539
            %v541 = vrot.slane %v540, 2
            %v542 = vmax.f32 %v540, %v541
            %v543 = vrot.slane %v542, 1
            %v544 = vmax.f32 %v542, %v543
            %v545 = vsub.f32 %v538, %v544
            %v546 = vmul.f32 %v545, 1.442695
            %v547 = vpow.pop %v546
            %v548 = vrot.slane %v547, 4
            %v549 = vadd.f32 %v547, %v548
            %v550 = vrot.slane %v549, 2
            %v551 = vadd.f32 %v549, %v550
            %v552 = vrot.slane %v551, 1
            %v553 = vadd.f32 %v551, %v552
            %v554 = vlog2.pop %v553
            %v555 = vmul.f32 %v554, 0.6931472
            %v556 = vadd.f32 %v544, %v555
            %v557 = vsub.f32 -2.0794415, %v556
            %v558 = vadd.f32 %v557, %v506
            %v559 = vsel %vm482, %v558, 0.0
            %560 = vst.msk [vmem:[#allocation3] sm:$0xff] %vm487, %v531
            %561 = vst [vmem:[#allocation4] sm:$0x1] %v559
            %v562 = vsub.f32 %v531, %v505
            %v563 = vand.u32 2147483647, %v562
            %v564 = vsel %vm487, %v563, 0.0
            %v565 = vrot.slane %v564, 4
            %v566 = vadd.f32 %v564, %v565
            %v567 = vrot.slane %v566, 2
            %v568 = vadd.f32 %v566, %v567
            %v569 = vrot.slane %v568, 1
            %v570 = vadd.f32 %v568, %v569
            %v571 = vmul.f32 %v570, 0.1
            %572 = vst.msk [vmem:[#allocation5] sm:$0x1] %vm490, %v571
          $region47: #{tpu_custom_call.1} parent=40 // pred_fallthru
            _
        $region41: #{tpu_custom_call.1} parent=27 // loop_footer
          %s497 = sadd.s32 1, %s493
        $region42: #{tpu_custom_call.1} parent=27 // loop_footer_branch
          %492 = sbr.rel target = $region38
        $region43: #{tpu_custom_call.1} parent=27 // loop_exit
          _
        %v573 = vld [vmem:[#allocation2] sm:$0xff]
        %v574 = vld [vmem:[#allocation3] sm:$0xff]
        %576 = vset.pattern.permute.xlu0 0
        %577 = vperm.xlu0 %576, %v574
        %v578 = vpop.permute.xlu0 %577
        %v580 = vadd.f32 %v573, %v578
        %v581 = vld [vmem:[#allocation4] sm:$0x1]
        %v583 = vlaneseq
        %v584 = vshrl.u32 %v583, 7
        %v585 = vsub.s32 0, %v584
        %v586 = vrot.slane %v581, %v585
        %v588 = vadd.f32 %v580, %v586
        %v589 = vmul.f32 %v588, 1.442695
        %v590 = vpow.pop %v589
        %591 = vst [vmem:[%s198] sm:$0xff] %v590
        %s592 = sand.u32 %s82, 1
        %s593 = scalar_lea.sflag [#allocation8], %s592
        %s594 = sand.u32 %s82, 1
        %s595 = smul.addr %s594, 8
        %s596 = scalar_lea.vmem [#allocation11], %s595
        // Predicated region
        $region48: #{tpu_custom_call.1} parent=27 // pred_check
          %p597 = pneg %p92
        $region49: #{tpu_custom_call.1} parent=27 // pred_check_branch
          %599 = sbr.rel (%p597) target = $region51
        $region50: #{tpu_custom_call.1} parent=27 // pred_region
          %s601 = ssub.s32 128, 128
          %602 = vsyncadd %s593, %s601
          %s603 = smul.addr %s22, 128
          %s604 = scalar_lea.hbm %s2, %s603
          %s606 = sshll.u32 %s596, 4
          %s607 = int_to_ptr.vmem [resolvable:$true] %s606
          %609 = dma.vmem_to_hbm [thread:$0]  %s607, 128, %s604, %s593
        $region51: #{tpu_custom_call.1} parent=27 // pred_fallthru
          _
      $region28: #{tpu_custom_call.1} parent=5 // pred_fallthru
        _
      %p610 = scmp.le.s32.totalorder 2, %s17
      // Predicated region
      $region52: #{tpu_custom_call.1} parent=5 // pred_check
        %p611 = pneg %p610
      $region53: #{tpu_custom_call.1} parent=5 // pred_check_branch
        %613 = sbr.rel (%p611) target = $region55
      $region54: #{tpu_custom_call.1} parent=5 // pred_region
        %s614 = ssub.s32 %s17, 2
        // Predicated region
        $region56: #{tpu_custom_call.1} parent=54 // pred_check
          %p615 = pneg %p98
        $region57: #{tpu_custom_call.1} parent=54 // pred_check_branch
          %617 = sbr.rel (%p615) target = $region59
        $region58: #{tpu_custom_call.1} parent=54 // pred_region
          %s618 = sand.u32 %s83, 1
          %s619 = scalar_lea.sflag [#allocation8], %s618
          %s620 = sand.u32 %s83, 1
          %s621 = smul.addr %s620, 8
          %s622 = scalar_lea.vmem [#allocation11], %s621
          %623 = dma.done %s619, 128
        $region59: #{tpu_custom_call.1} parent=54 // pred_fallthru
          _
      $region55: #{tpu_custom_call.1} parent=5 // pred_fallthru
        _
    $region6: #{tpu_custom_call.1} parent=1 // loop_footer
      %s21 = sadd.s32 1, %s17
    $region7: #{tpu_custom_call.1} parent=1 // loop_footer_branch
      %16 = sbr.rel target = $region3
    $region8: #{tpu_custom_call.1} parent=1 // loop_exit
      _
    %624 = vsyncpa [#allocation7], 1
    %s625 = scalar_lea.sflag [#allocation7], 1
    %626 = vsyncpa %s625, 1
    %627 = vsyncpa [#allocation10], 1
    %s628 = scalar_lea.sflag [#allocation10], 1
    %629 = vsyncpa %s628, 1
    %630 = vsyncpa [#allocation8], 1
    %s631 = scalar_lea.sflag [#allocation8], 1
    %632 = vsyncpa %s631, 1

</llo_original>
